<compile_context>
chip_gen: v6e
topology: v6e:2x2x1
jax: 0.10.0
libtpu: 0.0.40
codegen_flags: <defaults>
</compile_context>

<pallas_src>
import functools

import jax
import jax.numpy as jnp
from jax.experimental import pallas as pl
from jax.experimental.pallas import tpu as pltpu


def _temporal_conv_bn_kernel(x_ref, w_ref, b_ref, g_ref, be_ref, o_ref,
                             sum_ref, sumsq_ref, scale_ref, shift_ref, *,
                             taps, b_tile, eps, inv_count, recompute):
    """One grid step = (BN phase, batch tile).

    x_ref   : (b_tile, Cin, T*V)               bf16
    w_ref   : (K, Cout, Cin)                   bf16
    b/g/be  : (Cout, 1)                        f32
    o_ref   : recompute -> (b_tile, Cout, T_out*V) f32   per-tile block
              resident  -> (N,      Cout, T_out*V) f32   whole output, VMEM resident
    sum/sumsq/scale/shift : (Cout, 1) f32 scratch (persist across grid steps)
    """
    phase = pl.program_id(0)
    tile = pl.program_id(1)
    cout, tov = o_ref.shape[-2], o_ref.shape[-1]

    def out_row(b):
        # recompute path: rows are local to this step's block.
        # resident  path: the block holds the whole batch -> global batch index.
        return b if recompute else tile * b_tile + b

    def conv_row(row, b):
        # o_ref[row] <- conv_bias + sum_k W_k @ x[b] shifted by tap k.
        # Each tap only touches its statically-known valid output range, so the
        # temporal zero-padding needs no padded staging copy of x.
        o_ref[row] = jnp.broadcast_to(b_ref[...], (cout, tov))
        for k, olo, ilo, width in taps:              # K tiny & static: unrolled
            o_ref[row, :, pl.ds(olo, width)] = (
                o_ref[row, :, pl.ds(olo, width)]
                + jnp.dot(w_ref[k], x_ref[b, :, pl.ds(ilo, width)],
                          preferred_element_type=jnp.float32))

    @pl.when(jnp.logical_and(phase == 0, tile == 0))
    def _init_stats():
        sum_ref[...] = jnp.zeros_like(sum_ref)
        sumsq_ref[...] = jnp.zeros_like(sumsq_ref)

    # ---- phase 0: conv into the output block + per-channel batch statistics -
    @pl.when(phase == 0)
    def _phase0():
        for b in range(b_tile):
            row = out_row(b)
            conv_row(row, b)
            y = o_ref[row]
            # TODO(synk): E[x^2]-mean^2 can cancel in f32 for very large
            # N*T_out*V with |mean| >> std; switch to centered/Welford stats if
            # BN precision matters at such sizes.
            sum_ref[...] = sum_ref[...] + jnp.sum(y, axis=1, keepdims=True)
            sumsq_ref[...] = sumsq_ref[...] + jnp.sum(y * y, axis=1,
                                                      keepdims=True)

    # ---- phase 1: normalize with the global (biased) batch statistics -------
    @pl.when(phase == 1)
    def _phase1():
        @pl.when(tile == 0)
        def _hoist_bn_constants():          # computed once, reused per row
            mean = sum_ref[...] * inv_count
            var = jnp.maximum(sumsq_ref[...] * inv_count - mean * mean, 0.0)
            scale = g_ref[...] * jax.lax.rsqrt(var + eps)   # EUP rsqrt
            scale_ref[...] = scale
            shift_ref[...] = be_ref[...] - mean * scale

        for b in range(b_tile):
            row = out_row(b)
            if recompute:
                conv_row(row, b)            # pre-BN activations did not fit VMEM
            o_ref[row] = o_ref[row] * scale_ref[...] + shift_ref[...]


def temporal_conv(x_nchw, weight, bias, gamma, beta, *,
                  kernel_size, stride=1, dilation=1, eps=1e-5):
    """Forward of TemporalConv. x_nchw: (N, Cin, T, V) -> (N, Cout, T_out, V)."""
    # TODO(synk): temporal stride > 1 not implemented (module default is 1).
    assert stride == 1, "stride > 1 not supported by this kernel"
    # TODO(synk): BatchNorm running_mean/var buffer updates are not emitted
    # (training side effect, not part of the returned activation).
    n, cin, t, v = x_nchw.shape
    cout, _, k, _ = weight.shape
    assert k == kernel_size

    pad = (kernel_size + (kernel_size - 1) * (dilation - 1) - 1) // 2
    eff = (kernel_size - 1) * dilation + 1
    t_out = t + 2 * pad - eff + 1
    tv, tov = t * v, t_out * v

    # Per-tap valid output/input ranges (all static) -> no padded staging copy.
    taps = []
    for kk in range(kernel_size):
        olo_t = max(0, pad - kk * dilation)
        ohi_t = min(t_out, t + pad - kk * dilation)
        if ohi_t <= olo_t:
            continue
        ilo_t = olo_t + kk * dilation - pad
        taps.append((kk, olo_t * v, ilo_t * v, (ohi_t - olo_t) * v))

    # Free relayout NCHW -> (N, C, T*V); bf16 halves HBM/VMEM bytes for x and w
    # while accumulating in f32.
    x = x_nchw.reshape(n, cin, tv).astype(jnp.bfloat16)
    w = jnp.transpose(weight[:, :, :, 0], (2, 0, 1)).astype(jnp.bfloat16)  # (K,Cout,Cin)
    b2 = bias.reshape(cout, 1).astype(jnp.float32)
    g2 = gamma.reshape(cout, 1).astype(jnp.float32)
    be2 = beta.reshape(cout, 1).astype(jnp.float32)

    # ---- generation-aware VMEM budget (v5e/v6e: 128 MiB, v7x: 64 MiB) -------
    try:
        phys_vmem = int(pltpu.get_tpu_info().vmem_capacity_bytes)
    except Exception:
        phys_vmem = 64 * 1024 * 1024          # conservative default
    budget = int(min(phys_vmem * 3 // 4, 100 * 1024 * 1024))

    # ---- batch tiling + resident-vs-recompute decision -----------------------
    slack = 1 * 1024 * 1024                   # weights / BN params / scratch

    def fits_resident(bt):                    # whole f32 output resident in VMEM
        return 2 * n * cout * tov * 4 + 2 * bt * cin * tv * 2 + slack <= budget

    def fits_recompute(bt):                   # only per-tile blocks in VMEM
        return 2 * bt * cout * tov * 4 + 2 * bt * cin * tv * 2 + slack <= budget

    divisors = [d for d in range(min(n, 8), 0, -1) if n % d == 0]
    b_tile = next((d for d in divisors if fits_resident(d)), None)
    resident = b_tile is not None
    if not resident:
        b_tile = next((d for d in divisors if fits_recompute(d)), None)
    # TODO(synk): if even b_tile == 1 does not fit (huge Cout*T*V), the output /
    # temporal axes would also need tiling; not needed for ST-GCN-scale shapes.
    assert b_tile is not None, "per-sample blocks exceed the VMEM budget"
    n_tiles = n // b_tile

    if resident:
        # Output block = whole output, constant index -> written back once at
        # the end, already normalized.  Phase 1 does not re-read x (park on the
        # last tile so no extra DMA is issued).
        out_spec = pl.BlockSpec((n, cout, tov), lambda p, i: (0, 0, 0))
        x_spec = pl.BlockSpec(
            (b_tile, cin, tv),
            lambda p, i: (i * (1 - p) + p * (n_tiles - 1), 0, 0))
    else:
        # Recompute fallback: both phases fully define the output block before
        # it is flushed, so no uninitialized buffer can reach HBM.
        out_spec = pl.BlockSpec((b_tile, cout, tov), lambda p, i: (i, 0, 0))
        x_spec = pl.BlockSpec((b_tile, cin, tv), lambda p, i: (i, 0, 0))

    kernel = functools.partial(
        _temporal_conv_bn_kernel,
        taps=tuple(taps), b_tile=b_tile, eps=float(eps),
        inv_count=1.0 / float(n * t_out * v), recompute=not resident)

    out = pl.pallas_call(
        kernel,
        out_shape=jax.ShapeDtypeStruct((n, cout, tov), jnp.float32),
        grid=(2, n_tiles),  # (BN phase, batch tile); phase is the slow axis
        in_specs=[
            x_spec,                                                       # x
            pl.BlockSpec((kernel_size, cout, cin), lambda p, i: (0, 0, 0)),  # w
            pl.BlockSpec((cout, 1), lambda p, i: (0, 0)),                 # bias
            pl.BlockSpec((cout, 1), lambda p, i: (0, 0)),                 # gamma
            pl.BlockSpec((cout, 1), lambda p, i: (0, 0)),                 # beta
        ],
        out_specs=out_spec,
        scratch_shapes=[
            pltpu.VMEM((cout, 1), jnp.float32),   # per-channel sum
            pltpu.VMEM((cout, 1), jnp.float32),   # per-channel sum of squares
            pltpu.VMEM((cout, 1), jnp.float32),   # hoisted BN scale
            pltpu.VMEM((cout, 1), jnp.float32),   # hoisted BN shift
        ],
        compiler_params=pltpu.CompilerParams(
            # Both axes "arbitrary": BN statistics reduce across the whole grid
            # through per-core scratch, so the grid must run sequentially.
            # TODO(synk): for Cout >= 16 a leading Cout-tile "parallel" axis
            # (per-tile stats scratch) would use v7x's second TensorCore.
            dimension_semantics=("arbitrary", "arbitrary"),
            vmem_limit_bytes=budget,
        ),
    )(x, w, b2, g2, be2)

    return out.reshape(n, cout, t_out, v)


def reference(x_nchw, weight, bias, gamma, beta, kernel_size, stride, dilation, eps):
    """Pure-JAX reference matching PyTorch Conv2d + BatchNorm2d (train mode)."""
    pad = (kernel_size + (kernel_size - 1) * (dilation - 1) - 1) // 2
    n, cin, t, v = x_nchw.shape
    cout = weight.shape[0]
    eff = (kernel_size - 1) * dilation + 1
    t_out = (t + 2 * pad - eff) // stride + 1
    xp = jnp.pad(x_nchw, ((0, 0), (0, 0), (pad, pad), (0, 0)))
    y = jnp.zeros((n, cout, t_out, v), jnp.float32)
    for k in range(kernel_size):
        xs = xp[:, :, k * dilation: k * dilation + (t_out - 1) * stride + 1: stride, :]
        y = y + jnp.einsum('nctv,oc->notv', xs, weight[:, :, k, 0],
                           preferred_element_type=jnp.float32)
    y = y + bias[None, :, None, None]
    mean = jnp.mean(y, axis=(0, 2, 3), keepdims=True)
    var = jnp.mean((y - mean) ** 2, axis=(0, 2, 3), keepdims=True)
    return ((y - mean) * jax.lax.rsqrt(var + eps) * gamma[None, :, None, None]
            + beta[None, :, None, None])


if __name__ == "__main__":
    N, Cin, T, V = 2, 4, 16, 16     # (batch, in_channels, temporal, vertices)
    Cout, K = 8, 3                  # TemporalConv(4, 8, kernel_size=3)

    key = jax.random.PRNGKey(0)
    k1, k2, k3 = jax.random.split(key, 3)
    weight = jax.random.normal(k1, (Cout, Cin, K, 1), jnp.float32) * 0.1
    bias = jax.random.normal(k2, (Cout,), jnp.float32) * 0.1
    gamma = jnp.ones((Cout,), jnp.float32)   # BatchNorm2d default weight init
    beta = jnp.zeros((Cout,), jnp.float32)   # BatchNorm2d default bias init
    x = jax.random.normal(k3, (N, Cin, T, V), jnp.float32)

    out = temporal_conv(x, weight, bias, gamma, beta, kernel_size=K)
    out = jax.block_until_ready(out)

    # Compare against the reference evaluated on the same bf16-rounded x / w
    # (the kernel casts those at its boundary; BN math stays in f32 in both).
    x_bf = x.astype(jnp.bfloat16).astype(jnp.float32)
    w_bf = weight.astype(jnp.bfloat16).astype(jnp.float32)
    ref = reference(x_bf, w_bf, bias, gamma, beta, K, 1, 1, 1e-5)
    assert out.shape == ref.shape, (out.shape, ref.shape)
    err = float(jnp.max(jnp.abs(out - ref)))
    assert jnp.allclose(out, ref, atol=2e-3, rtol=2e-3), f"max abs err {err}"
    print("KERNEL_OK")
</pallas_src>

<mosaic_0001>
module attributes {stable_mosaic.version = 11 : i64} {
  func.func @_temporal_conv_bn_kernel(%arg0: i32, %arg1: i32, %arg2: memref<2x4x256xbf16, #tpu.memory_space<vmem>>, %arg3: memref<3x8x4xbf16, #tpu.memory_space<vmem>>, %arg4: memref<8x1xf32, #tpu.memory_space<vmem>>, %arg5: memref<8x1xf32, #tpu.memory_space<vmem>>, %arg6: memref<8x1xf32, #tpu.memory_space<vmem>>, %arg7: memref<2x8x256xf32, #tpu.memory_space<vmem>>, %arg8: memref<8x1xf32, #tpu.memory_space<vmem>>, %arg9: memref<8x1xf32, #tpu.memory_space<vmem>>, %arg10: memref<8x1xf32, #tpu.memory_space<vmem>>, %arg11: memref<8x1xf32, #tpu.memory_space<vmem>>) attributes {dimension_semantics = [#tpu.dimension_semantics<arbitrary>, #tpu.dimension_semantics<arbitrary>], iteration_bounds = array<i64: 2, 1>, scalar_prefetch = 0 : i64, scratch_operands = 4 : i64, tpu.core_type = #tpu.core_type<tc>, window_params = [{transform_indices = @transform_0, window_bounds = array<i64: 2, 4, 256>}, {pipeline_mode = #tpu.pipeline_mode<synchronous>, transform_indices = @transform_1, window_bounds = array<i64: 3, 8, 4>}, {pipeline_mode = #tpu.pipeline_mode<synchronous>, transform_indices = @transform_2, window_bounds = array<i64: 8, 1>}, {pipeline_mode = #tpu.pipeline_mode<synchronous>, transform_indices = @transform_3, window_bounds = array<i64: 8, 1>}, {pipeline_mode = #tpu.pipeline_mode<synchronous>, transform_indices = @transform_4, window_bounds = array<i64: 8, 1>}, {pipeline_mode = #tpu.pipeline_mode<synchronous>, transform_indices = @transform_5, window_bounds = array<i64: 2, 8, 256>}]} {
    %c0_i32 = arith.constant 0 : i32
    %0 = arith.cmpi eq, %arg0, %c0_i32 : i32
    %c0_i32_0 = arith.constant 0 : i32
    %1 = arith.cmpi eq, %arg1, %c0_i32_0 : i32
    %2 = arith.andi %0, %1 : i1
    %3 = arith.extui %2 : i1 to i32
    %c0_i32_1 = arith.constant 0 : i32
    %4 = arith.cmpi ne, %3, %c0_i32_1 : i32
    scf.if %4 {
      %cst = arith.constant 0.000000e+00 : f32
      %11 = vector.broadcast %cst : f32 to vector<8x1xf32>
      %c0 = arith.constant 0 : index
      %c0_5 = arith.constant 0 : index
      %12 = vector.load %arg8[%c0, %c0_5] : memref<8x1xf32, #tpu.memory_space<vmem>>, vector<8x1xf32>
      tpu.vector_store %arg8[%c0, %c0_5], %11 {strides = array<i32>} : memref<8x1xf32, #tpu.memory_space<vmem>>, vector<8x1xf32>,
      %cst_6 = arith.constant 0.000000e+00 : f32
      %13 = vector.broadcast %cst_6 : f32 to vector<8x1xf32>
      %c0_7 = arith.constant 0 : index
      %c0_8 = arith.constant 0 : index
      %14 = vector.load %arg9[%c0_7, %c0_8] : memref<8x1xf32, #tpu.memory_space<vmem>>, vector<8x1xf32>
      tpu.vector_store %arg9[%c0_7, %c0_8], %13 {strides = array<i32>} : memref<8x1xf32, #tpu.memory_space<vmem>>, vector<8x1xf32>,
    } else {
    }
    %c0_i32_2 = arith.constant 0 : i32
    %5 = arith.cmpi eq, %arg0, %c0_i32_2 : i32
    %6 = arith.extui %5 : i1 to i32
    %c0_i32_3 = arith.constant 0 : i32
    %7 = arith.cmpi ne, %6, %c0_i32_3 : i32
    scf.if %7 {
      %c2_i32 = arith.constant 2 : i32
      %11 = arith.muli %arg1, %c2_i32 : i32
      %c0_i32_5 = arith.constant 0 : i32
      %12 = arith.addi %11, %c0_i32_5 : i32
      %c0 = arith.constant 0 : index
      %c0_6 = arith.constant 0 : index
      %13 = vector.load %arg4[%c0, %c0_6] : memref<8x1xf32, #tpu.memory_space<vmem>>, vector<8x1xf32>
      %14 = vector.shape_cast %13 : vector<8x1xf32> to vector<8x1xf32>
      %15 = vector.broadcast %14 : vector<8x1xf32> to vector<8x256xf32>
      %16 = arith.index_cast %12 : i32 to index
      %c0_7 = arith.constant 0 : index
      %c0_8 = arith.constant 0 : index
      %17 = vector.load %arg7[%16, %c0_7, %c0_8] : memref<2x8x256xf32, #tpu.memory_space<vmem>>, vector<1x8x256xf32>
      %18 = vector.shape_cast %17 : vector<1x8x256xf32> to vector<8x256xf32>
      %19 = vector.shape_cast %15 : vector<8x256xf32> to vector<1x8x256xf32>
      tpu.vector_store %arg7[%16, %c0_7, %c0_8], %19 {strides = array<i32>} : memref<2x8x256xf32, #tpu.memory_space<vmem>>, vector<1x8x256xf32>,
      %20 = arith.index_cast %12 : i32 to index
      %c0_9 = arith.constant 0 : index
      %c16 = arith.constant 16 : index
      %21 = vector.load %arg7[%20, %c0_9, %c16] : memref<2x8x256xf32, #tpu.memory_space<vmem>>, vector<1x8x240xf32>
      %22 = vector.shape_cast %21 : vector<1x8x240xf32> to vector<8x240xf32>
      %c0_10 = arith.constant 0 : index
      %c0_11 = arith.constant 0 : index
      %c0_12 = arith.constant 0 : index
      %23 = vector.load %arg3[%c0_10, %c0_11, %c0_12] : memref<3x8x4xbf16, #tpu.memory_space<vmem>>, vector<1x8x4xbf16>
      %24 = vector.shape_cast %23 : vector<1x8x4xbf16> to vector<8x4xbf16>
      %c0_13 = arith.constant 0 : index
      %c0_14 = arith.constant 0 : index
      %c0_15 = arith.constant 0 : index
      %25 = vector.load %arg2[%c0_13, %c0_14, %c0_15] : memref<2x4x256xbf16, #tpu.memory_space<vmem>>, vector<1x4x240xbf16>
      %26 = vector.shape_cast %25 : vector<1x4x240xbf16> to vector<4x240xbf16>
      %cst = arith.constant dense<0.000000e+00> : vector<8x240xf32>
      %27 = tpu.matmul %24, %26, %cst {dimension_numbers = #tpu.dot_dimension_numbers<[1], [0], [0], [1], [0, 0, 1, 1], [], []>} : vector<8x4xbf16>, vector<4x240xbf16>, vector<8x240xf32> -> vector<8x240xf32>
      %28 = arith.addf %22, %27 : vector<8x240xf32>
      %29 = arith.index_cast %12 : i32 to index
      %c0_16 = arith.constant 0 : index
      %c16_17 = arith.constant 16 : index
      %30 = vector.load %arg7[%29, %c0_16, %c16_17] : memref<2x8x256xf32, #tpu.memory_space<vmem>>, vector<1x8x240xf32>
      %31 = vector.shape_cast %30 : vector<1x8x240xf32> to vector<8x240xf32>
      %32 = vector.shape_cast %28 : vector<8x240xf32> to vector<1x8x240xf32>
      tpu.vector_store %arg7[%29, %c0_16, %c16_17], %32 {strides = array<i32>} : memref<2x8x256xf32, #tpu.memory_space<vmem>>, vector<1x8x240xf32>,
      %33 = arith.index_cast %12 : i32 to index
      %c0_18 = arith.constant 0 : index
      %c0_19 = arith.constant 0 : index
      %34 = vector.load %arg7[%33, %c0_18, %c0_19] : memref<2x8x256xf32, #tpu.memory_space<vmem>>, vector<1x8x256xf32>
      %35 = vector.shape_cast %34 : vector<1x8x256xf32> to vector<8x256xf32>
      %c1 = arith.constant 1 : index
      %c0_20 = arith.constant 0 : index
      %c0_21 = arith.constant 0 : index
      %36 = vector.load %arg3[%c1, %c0_20, %c0_21] : memref<3x8x4xbf16, #tpu.memory_space<vmem>>, vector<1x8x4xbf16>
      %37 = vector.shape_cast %36 : vector<1x8x4xbf16> to vector<8x4xbf16>
      %c0_22 = arith.constant 0 : index
      %c0_23 = arith.constant 0 : index
      %c0_24 = arith.constant 0 : index
      %38 = vector.load %arg2[%c0_22, %c0_23, %c0_24] : memref<2x4x256xbf16, #tpu.memory_space<vmem>>, vector<1x4x256xbf16>
      %39 = vector.shape_cast %38 : vector<1x4x256xbf16> to vector<4x256xbf16>
      %cst_25 = arith.constant dense<0.000000e+00> : vector<8x256xf32>
      %40 = tpu.matmul %37, %39, %cst_25 {dimension_numbers = #tpu.dot_dimension_numbers<[1], [0], [0], [1], [0, 0, 1, 1], [], []>} : vector<8x4xbf16>, vector<4x256xbf16>, vector<8x256xf32> -> vector<8x256xf32>
      %41 = arith.addf %35, %40 : vector<8x256xf32>
      %42 = arith.index_cast %12 : i32 to index
      %c0_26 = arith.constant 0 : index
      %c0_27 = arith.constant 0 : index
      %43 = vector.load %arg7[%42, %c0_26, %c0_27] : memref<2x8x256xf32, #tpu.memory_space<vmem>>, vector<1x8x256xf32>
      %44 = vector.shape_cast %43 : vector<1x8x256xf32> to vector<8x256xf32>
      %45 = vector.shape_cast %41 : vector<8x256xf32> to vector<1x8x256xf32>
      tpu.vector_store %arg7[%42, %c0_26, %c0_27], %45 {strides = array<i32>} : memref<2x8x256xf32, #tpu.memory_space<vmem>>, vector<1x8x256xf32>,
      %46 = arith.index_cast %12 : i32 to index
      %c0_28 = arith.constant 0 : index
      %c0_29 = arith.constant 0 : index
      %47 = vector.load %arg7[%46, %c0_28, %c0_29] : memref<2x8x256xf32, #tpu.memory_space<vmem>>, vector<1x8x240xf32>
      %48 = vector.shape_cast %47 : vector<1x8x240xf32> to vector<8x240xf32>
      %c2 = arith.constant 2 : index
      %c0_30 = arith.constant 0 : index
      %c0_31 = arith.constant 0 : index
      %49 = vector.load %arg3[%c2, %c0_30, %c0_31] : memref<3x8x4xbf16, #tpu.memory_space<vmem>>, vector<1x8x4xbf16>
      %50 = vector.shape_cast %49 : vector<1x8x4xbf16> to vector<8x4xbf16>
      %c0_32 = arith.constant 0 : index
      %c0_33 = arith.constant 0 : index
      %c16_34 = arith.constant 16 : index
      %51 = vector.load %arg2[%c0_32, %c0_33, %c16_34] : memref<2x4x256xbf16, #tpu.memory_space<vmem>>, vector<1x4x240xbf16>
      %52 = vector.shape_cast %51 : vector<1x4x240xbf16> to vector<4x240xbf16>
      %cst_35 = arith.constant dense<0.000000e+00> : vector<8x240xf32>
      %53 = tpu.matmul %50, %52, %cst_35 {dimension_numbers = #tpu.dot_dimension_numbers<[1], [0], [0], [1], [0, 0, 1, 1], [], []>} : vector<8x4xbf16>, vector<4x240xbf16>, vector<8x240xf32> -> vector<8x240xf32>
      %54 = arith.addf %48, %53 : vector<8x240xf32>
      %55 = arith.index_cast %12 : i32 to index
      %c0_36 = arith.constant 0 : index
      %c0_37 = arith.constant 0 : index
      %56 = vector.load %arg7[%55, %c0_36, %c0_37] : memref<2x8x256xf32, #tpu.memory_space<vmem>>, vector<1x8x240xf32>
      %57 = vector.shape_cast %56 : vector<1x8x240xf32> to vector<8x240xf32>
      %58 = vector.shape_cast %54 : vector<8x240xf32> to vector<1x8x240xf32>
      tpu.vector_store %arg7[%55, %c0_36, %c0_37], %58 {strides = array<i32>} : memref<2x8x256xf32, #tpu.memory_space<vmem>>, vector<1x8x240xf32>,
      %59 = arith.index_cast %12 : i32 to index
      %c0_38 = arith.constant 0 : index
      %c0_39 = arith.constant 0 : index
      %60 = vector.load %arg7[%59, %c0_38, %c0_39] : memref<2x8x256xf32, #tpu.memory_space<vmem>>, vector<1x8x256xf32>
      %61 = vector.shape_cast %60 : vector<1x8x256xf32> to vector<8x256xf32>
      %c0_40 = arith.constant 0 : index
      %c0_41 = arith.constant 0 : index
      %62 = vector.load %arg8[%c0_40, %c0_41] : memref<8x1xf32, #tpu.memory_space<vmem>>, vector<8x1xf32>
      %cst_42 = arith.constant dense<0.000000e+00> : vector<8xf32>
      %63 = vector.multi_reduction <add>, %61, %cst_42 [1] : vector<8x256xf32> to vector<8xf32>
      %64 = vector.shape_cast %63 : vector<8xf32> to vector<8x1xf32>
      %65 = arith.addf %62, %64 : vector<8x1xf32>
      %c0_43 = arith.constant 0 : index
      %c0_44 = arith.constant 0 : index
      %66 = vector.load %arg8[%c0_43, %c0_44] : memref<8x1xf32, #tpu.memory_space<vmem>>, vector<8x1xf32>
      tpu.vector_store %arg8[%c0_43, %c0_44], %65 {strides = array<i32>} : memref<8x1xf32, #tpu.memory_space<vmem>>, vector<8x1xf32>,
      %c0_45 = arith.constant 0 : index
      %c0_46 = arith.constant 0 : index
      %67 = vector.load %arg9[%c0_45, %c0_46] : memref<8x1xf32, #tpu.memory_space<vmem>>, vector<8x1xf32>
      %68 = arith.mulf %61, %61 : vector<8x256xf32>
      %cst_47 = arith.constant dense<0.000000e+00> : vector<8xf32>
      %69 = vector.multi_reduction <add>, %68, %cst_47 [1] : vector<8x256xf32> to vector<8xf32>
      %70 = vector.shape_cast %69 : vector<8xf32> to vector<8x1xf32>
      %71 = arith.addf %67, %70 : vector<8x1xf32>
      %c0_48 = arith.constant 0 : index
      %c0_49 = arith.constant 0 : index
      %72 = vector.load %arg9[%c0_48, %c0_49] : memref<8x1xf32, #tpu.memory_space<vmem>>, vector<8x1xf32>
      tpu.vector_store %arg9[%c0_48, %c0_49], %71 {strides = array<i32>} : memref<8x1xf32, #tpu.memory_space<vmem>>, vector<8x1xf32>,
      %c2_i32_50 = arith.constant 2 : i32
      %73 = arith.muli %arg1, %c2_i32_50 : i32
      %c1_i32_51 = arith.constant 1 : i32
      %74 = arith.addi %73, %c1_i32_51 : i32
      %c0_52 = arith.constant 0 : index
      %c0_53 = arith.constant 0 : index
      %75 = vector.load %arg4[%c0_52, %c0_53] : memref<8x1xf32, #tpu.memory_space<vmem>>, vector<8x1xf32>
      %76 = vector.shape_cast %75 : vector<8x1xf32> to vector<8x1xf32>
      %77 = vector.broadcast %76 : vector<8x1xf32> to vector<8x256xf32>
      %78 = arith.index_cast %74 : i32 to index
      %c0_54 = arith.constant 0 : index
      %c0_55 = arith.constant 0 : index
      %79 = vector.load %arg7[%78, %c0_54, %c0_55] : memref<2x8x256xf32, #tpu.memory_space<vmem>>, vector<1x8x256xf32>
      %80 = vector.shape_cast %79 : vector<1x8x256xf32> to vector<8x256xf32>
      %81 = vector.shape_cast %77 : vector<8x256xf32> to vector<1x8x256xf32>
      tpu.vector_store %arg7[%78, %c0_54, %c0_55], %81 {strides = array<i32>} : memref<2x8x256xf32, #tpu.memory_space<vmem>>, vector<1x8x256xf32>,
      %82 = arith.index_cast %74 : i32 to index
      %c0_56 = arith.constant 0 : index
      %c16_57 = arith.constant 16 : index
      %83 = vector.load %arg7[%82, %c0_56, %c16_57] : memref<2x8x256xf32, #tpu.memory_space<vmem>>, vector<1x8x240xf32>
      %84 = vector.shape_cast %83 : vector<1x8x240xf32> to vector<8x240xf32>
      %c0_58 = arith.constant 0 : index
      %c0_59 = arith.constant 0 : index
      %c0_60 = arith.constant 0 : index
      %85 = vector.load %arg3[%c0_58, %c0_59, %c0_60] : memref<3x8x4xbf16, #tpu.memory_space<vmem>>, vector<1x8x4xbf16>
      %86 = vector.shape_cast %85 : vector<1x8x4xbf16> to vector<8x4xbf16>
      %c1_61 = arith.constant 1 : index
      %c0_62 = arith.constant 0 : index
      %c0_63 = arith.constant 0 : index
      %87 = vector.load %arg2[%c1_61, %c0_62, %c0_63] : memref<2x4x256xbf16, #tpu.memory_space<vmem>>, vector<1x4x240xbf16>
      %88 = vector.shape_cast %87 : vector<1x4x240xbf16> to vector<4x240xbf16>
      %cst_64 = arith.constant dense<0.000000e+00> : vector<8x240xf32>
      %89 = tpu.matmul %86, %88, %cst_64 {dimension_numbers = #tpu.dot_dimension_numbers<[1], [0], [0], [1], [0, 0, 1, 1], [], []>} : vector<8x4xbf16>, vector<4x240xbf16>, vector<8x240xf32> -> vector<8x240xf32>
      %90 = arith.addf %84, %89 : vector<8x240xf32>
      %91 = arith.index_cast %74 : i32 to index
      %c0_65 = arith.constant 0 : index
      %c16_66 = arith.constant 16 : index
      %92 = vector.load %arg7[%91, %c0_65, %c16_66] : memref<2x8x256xf32, #tpu.memory_space<vmem>>, vector<1x8x240xf32>
      %93 = vector.shape_cast %92 : vector<1x8x240xf32> to vector<8x240xf32>
      %94 = vector.shape_cast %90 : vector<8x240xf32> to vector<1x8x240xf32>
      tpu.vector_store %arg7[%91, %c0_65, %c16_66], %94 {strides = array<i32>} : memref<2x8x256xf32, #tpu.memory_space<vmem>>, vector<1x8x240xf32>,
      %95 = arith.index_cast %74 : i32 to index
      %c0_67 = arith.constant 0 : index
      %c0_68 = arith.constant 0 : index
      %96 = vector.load %arg7[%95, %c0_67, %c0_68] : memref<2x8x256xf32, #tpu.memory_space<vmem>>, vector<1x8x256xf32>
      %97 = vector.shape_cast %96 : vector<1x8x256xf32> to vector<8x256xf32>
      %c1_69 = arith.constant 1 : index
      %c0_70 = arith.constant 0 : index
      %c0_71 = arith.constant 0 : index
      %98 = vector.load %arg3[%c1_69, %c0_70, %c0_71] : memref<3x8x4xbf16, #tpu.memory_space<vmem>>, vector<1x8x4xbf16>
      %99 = vector.shape_cast %98 : vector<1x8x4xbf16> to vector<8x4xbf16>
      %c1_72 = arith.constant 1 : index
      %c0_73 = arith.constant 0 : index
      %c0_74 = arith.constant 0 : index
      %100 = vector.load %arg2[%c1_72, %c0_73, %c0_74] : memref<2x4x256xbf16, #tpu.memory_space<vmem>>, vector<1x4x256xbf16>
      %101 = vector.shape_cast %100 : vector<1x4x256xbf16> to vector<4x256xbf16>
      %cst_75 = arith.constant dense<0.000000e+00> : vector<8x256xf32>
      %102 = tpu.matmul %99, %101, %cst_75 {dimension_numbers = #tpu.dot_dimension_numbers<[1], [0], [0], [1], [0, 0, 1, 1], [], []>} : vector<8x4xbf16>, vector<4x256xbf16>, vector<8x256xf32> -> vector<8x256xf32>
      %103 = arith.addf %97, %102 : vector<8x256xf32>
      %104 = arith.index_cast %74 : i32 to index
      %c0_76 = arith.constant 0 : index
      %c0_77 = arith.constant 0 : index
      %105 = vector.load %arg7[%104, %c0_76, %c0_77] : memref<2x8x256xf32, #tpu.memory_space<vmem>>, vector<1x8x256xf32>
      %106 = vector.shape_cast %105 : vector<1x8x256xf32> to vector<8x256xf32>
      %107 = vector.shape_cast %103 : vector<8x256xf32> to vector<1x8x256xf32>
      tpu.vector_store %arg7[%104, %c0_76, %c0_77], %107 {strides = array<i32>} : memref<2x8x256xf32, #tpu.memory_space<vmem>>, vector<1x8x256xf32>,
      %108 = arith.index_cast %74 : i32 to index
      %c0_78 = arith.constant 0 : index
      %c0_79 = arith.constant 0 : index
      %109 = vector.load %arg7[%108, %c0_78, %c0_79] : memref<2x8x256xf32, #tpu.memory_space<vmem>>, vector<1x8x240xf32>
      %110 = vector.shape_cast %109 : vector<1x8x240xf32> to vector<8x240xf32>
      %c2_80 = arith.constant 2 : index
      %c0_81 = arith.constant 0 : index
      %c0_82 = arith.constant 0 : index
      %111 = vector.load %arg3[%c2_80, %c0_81, %c0_82] : memref<3x8x4xbf16, #tpu.memory_space<vmem>>, vector<1x8x4xbf16>
      %112 = vector.shape_cast %111 : vector<1x8x4xbf16> to vector<8x4xbf16>
      %c1_83 = arith.constant 1 : index
      %c0_84 = arith.constant 0 : index
      %c16_85 = arith.constant 16 : index
      %113 = vector.load %arg2[%c1_83, %c0_84, %c16_85] : memref<2x4x256xbf16, #tpu.memory_space<vmem>>, vector<1x4x240xbf16>
      %114 = vector.shape_cast %113 : vector<1x4x240xbf16> to vector<4x240xbf16>
      %cst_86 = arith.constant dense<0.000000e+00> : vector<8x240xf32>
      %115 = tpu.matmul %112, %114, %cst_86 {dimension_numbers = #tpu.dot_dimension_numbers<[1], [0], [0], [1], [0, 0, 1, 1], [], []>} : vector<8x4xbf16>, vector<4x240xbf16>, vector<8x240xf32> -> vector<8x240xf32>
      %116 = arith.addf %110, %115 : vector<8x240xf32>
      %117 = arith.index_cast %74 : i32 to index
      %c0_87 = arith.constant 0 : index
      %c0_88 = arith.constant 0 : index
      %118 = vector.load %arg7[%117, %c0_87, %c0_88] : memref<2x8x256xf32, #tpu.memory_space<vmem>>, vector<1x8x240xf32>
      %119 = vector.shape_cast %118 : vector<1x8x240xf32> to vector<8x240xf32>
      %120 = vector.shape_cast %116 : vector<8x240xf32> to vector<1x8x240xf32>
      tpu.vector_store %arg7[%117, %c0_87, %c0_88], %120 {strides = array<i32>} : memref<2x8x256xf32, #tpu.memory_space<vmem>>, vector<1x8x240xf32>,
      %121 = arith.index_cast %74 : i32 to index
      %c0_89 = arith.constant 0 : index
      %c0_90 = arith.constant 0 : index
      %122 = vector.load %arg7[%121, %c0_89, %c0_90] : memref<2x8x256xf32, #tpu.memory_space<vmem>>, vector<1x8x256xf32>
      %123 = vector.shape_cast %122 : vector<1x8x256xf32> to vector<8x256xf32>
      %c0_91 = arith.constant 0 : index
      %c0_92 = arith.constant 0 : index
      %124 = vector.load %arg8[%c0_91, %c0_92] : memref<8x1xf32, #tpu.memory_space<vmem>>, vector<8x1xf32>
      %cst_93 = arith.constant dense<0.000000e+00> : vector<8xf32>
      %125 = vector.multi_reduction <add>, %123, %cst_93 [1] : vector<8x256xf32> to vector<8xf32>
      %126 = vector.shape_cast %125 : vector<8xf32> to vector<8x1xf32>
      %127 = arith.addf %124, %126 : vector<8x1xf32>
      %c0_94 = arith.constant 0 : index
      %c0_95 = arith.constant 0 : index
      %128 = vector.load %arg8[%c0_94, %c0_95] : memref<8x1xf32, #tpu.memory_space<vmem>>, vector<8x1xf32>
      tpu.vector_store %arg8[%c0_94, %c0_95], %127 {strides = array<i32>} : memref<8x1xf32, #tpu.memory_space<vmem>>, vector<8x1xf32>,
      %c0_96 = arith.constant 0 : index
      %c0_97 = arith.constant 0 : index
      %129 = vector.load %arg9[%c0_96, %c0_97] : memref<8x1xf32, #tpu.memory_space<vmem>>, vector<8x1xf32>
      %130 = arith.mulf %123, %123 : vector<8x256xf32>
      %cst_98 = arith.constant dense<0.000000e+00> : vector<8xf32>
      %131 = vector.multi_reduction <add>, %130, %cst_98 [1] : vector<8x256xf32> to vector<8xf32>
      %132 = vector.shape_cast %131 : vector<8xf32> to vector<8x1xf32>
      %133 = arith.addf %129, %132 : vector<8x1xf32>
      %c0_99 = arith.constant 0 : index
      %c0_100 = arith.constant 0 : index
      %134 = vector.load %arg9[%c0_99, %c0_100] : memref<8x1xf32, #tpu.memory_space<vmem>>, vector<8x1xf32>
      tpu.vector_store %arg9[%c0_99, %c0_100], %133 {strides = array<i32>} : memref<8x1xf32, #tpu.memory_space<vmem>>, vector<8x1xf32>,
    } else {
    }
    %c1_i32 = arith.constant 1 : i32
    %8 = arith.cmpi eq, %arg0, %c1_i32 : i32
    %9 = arith.extui %8 : i1 to i32
    %c0_i32_4 = arith.constant 0 : i32
    %10 = arith.cmpi ne, %9, %c0_i32_4 : i32
    scf.if %10 {
      %c0_i32_5 = arith.constant 0 : i32
      %11 = arith.cmpi eq, %arg1, %c0_i32_5 : i32
      %12 = arith.extui %11 : i1 to i32
      %c0_i32_6 = arith.constant 0 : i32
      %13 = arith.cmpi ne, %12, %c0_i32_6 : i32
      scf.if %13 {
        %c0_25 = arith.constant 0 : index
        %c0_26 = arith.constant 0 : index
        %44 = vector.load %arg8[%c0_25, %c0_26] : memref<8x1xf32, #tpu.memory_space<vmem>>, vector<8x1xf32>
        %cst = arith.constant 0.001953125 : f32
        %45 = vector.broadcast %cst : f32 to vector<8x1xf32>
        %46 = arith.mulf %44, %45 : vector<8x1xf32>
        %c0_27 = arith.constant 0 : index
        %c0_28 = arith.constant 0 : index
        %47 = vector.load %arg9[%c0_27, %c0_28] : memref<8x1xf32, #tpu.memory_space<vmem>>, vector<8x1xf32>
        %cst_29 = arith.constant 0.001953125 : f32
        %48 = vector.broadcast %cst_29 : f32 to vector<8x1xf32>
        %49 = arith.mulf %47, %48 : vector<8x1xf32>
        %50 = arith.mulf %46, %46 : vector<8x1xf32>
        %51 = arith.subf %49, %50 : vector<8x1xf32>
        %cst_30 = arith.constant 0.000000e+00 : f32
        %52 = vector.broadcast %cst_30 : f32 to vector<8x1xf32>
        %53 = arith.maximumf %51, %52 : vector<8x1xf32>
        %c0_31 = arith.constant 0 : index
        %c0_32 = arith.constant 0 : index
        %54 = vector.load %arg5[%c0_31, %c0_32] : memref<8x1xf32, #tpu.memory_space<vmem>>, vector<8x1xf32>
        %cst_33 = arith.constant 9.99999974E-6 : f32
        %55 = vector.broadcast %cst_33 : f32 to vector<8x1xf32>
        %56 = arith.addf %53, %55 : vector<8x1xf32>
        %57 = math.rsqrt %56 : vector<8x1xf32>
        %58 = arith.mulf %54, %57 : vector<8x1xf32>
        %c0_34 = arith.constant 0 : index
        %c0_35 = arith.constant 0 : index
        %59 = vector.load %arg10[%c0_34, %c0_35] : memref<8x1xf32, #tpu.memory_space<vmem>>, vector<8x1xf32>
        tpu.vector_store %arg10[%c0_34, %c0_35], %58 {strides = array<i32>} : memref<8x1xf32, #tpu.memory_space<vmem>>, vector<8x1xf32>,
        %c0_36 = arith.constant 0 : index
        %c0_37 = arith.constant 0 : index
        %60 = vector.load %arg6[%c0_36, %c0_37] : memref<8x1xf32, #tpu.memory_space<vmem>>, vector<8x1xf32>
        %61 = arith.mulf %46, %58 : vector<8x1xf32>
        %62 = arith.subf %60, %61 : vector<8x1xf32>
        %c0_38 = arith.constant 0 : index
        %c0_39 = arith.constant 0 : index
        %63 = vector.load %arg11[%c0_38, %c0_39] : memref<8x1xf32, #tpu.memory_space<vmem>>, vector<8x1xf32>
        tpu.vector_store %arg11[%c0_38, %c0_39], %62 {strides = array<i32>} : memref<8x1xf32, #tpu.memory_space<vmem>>, vector<8x1xf32>,
      } else {
      }
      %c2_i32 = arith.constant 2 : i32
      %14 = arith.muli %arg1, %c2_i32 : i32
      %c0_i32_7 = arith.constant 0 : i32
      %15 = arith.addi %14, %c0_i32_7 : i32
      %16 = arith.index_cast %15 : i32 to index
      %c0 = arith.constant 0 : index
      %c0_8 = arith.constant 0 : index
      %17 = vector.load %arg7[%16, %c0, %c0_8] : memref<2x8x256xf32, #tpu.memory_space<vmem>>, vector<1x8x256xf32>
      %18 = vector.shape_cast %17 : vector<1x8x256xf32> to vector<8x256xf32>
      %c0_9 = arith.constant 0 : index
      %c0_10 = arith.constant 0 : index
      %19 = vector.load %arg10[%c0_9, %c0_10] : memref<8x1xf32, #tpu.memory_space<vmem>>, vector<8x1xf32>
      %20 = vector.broadcast %19 : vector<8x1xf32> to vector<8x256xf32>
      %21 = arith.mulf %18, %20 : vector<8x256xf32>
      %c0_11 = arith.constant 0 : index
      %c0_12 = arith.constant 0 : index
      %22 = vector.load %arg11[%c0_11, %c0_12] : memref<8x1xf32, #tpu.memory_space<vmem>>, vector<8x1xf32>
      %23 = vector.broadcast %22 : vector<8x1xf32> to vector<8x256xf32>
      %24 = arith.addf %21, %23 : vector<8x256xf32>
      %25 = arith.index_cast %15 : i32 to index
      %c0_13 = arith.constant 0 : index
      %c0_14 = arith.constant 0 : index
      %26 = vector.load %arg7[%25, %c0_13, %c0_14] : memref<2x8x256xf32, #tpu.memory_space<vmem>>, vector<1x8x256xf32>
      %27 = vector.shape_cast %26 : vector<1x8x256xf32> to vector<8x256xf32>
      %28 = vector.shape_cast %24 : vector<8x256xf32> to vector<1x8x256xf32>
      tpu.vector_store %arg7[%25, %c0_13, %c0_14], %28 {strides = array<i32>} : memref<2x8x256xf32, #tpu.memory_space<vmem>>, vector<1x8x256xf32>,
      %c2_i32_15 = arith.constant 2 : i32
      %29 = arith.muli %arg1, %c2_i32_15 : i32
      %c1_i32_16 = arith.constant 1 : i32
      %30 = arith.addi %29, %c1_i32_16 : i32
      %31 = arith.index_cast %30 : i32 to index
      %c0_17 = arith.constant 0 : index
      %c0_18 = arith.constant 0 : index
      %32 = vector.load %arg7[%31, %c0_17, %c0_18] : memref<2x8x256xf32, #tpu.memory_space<vmem>>, vector<1x8x256xf32>
      %33 = vector.shape_cast %32 : vector<1x8x256xf32> to vector<8x256xf32>
      %c0_19 = arith.constant 0 : index
      %c0_20 = arith.constant 0 : index
      %34 = vector.load %arg10[%c0_19, %c0_20] : memref<8x1xf32, #tpu.memory_space<vmem>>, vector<8x1xf32>
      %35 = vector.broadcast %34 : vector<8x1xf32> to vector<8x256xf32>
      %36 = arith.mulf %33, %35 : vector<8x256xf32>
      %c0_21 = arith.constant 0 : index
      %c0_22 = arith.constant 0 : index
      %37 = vector.load %arg11[%c0_21, %c0_22] : memref<8x1xf32, #tpu.memory_space<vmem>>, vector<8x1xf32>
      %38 = vector.broadcast %37 : vector<8x1xf32> to vector<8x256xf32>
      %39 = arith.addf %36, %38 : vector<8x256xf32>
      %40 = arith.index_cast %30 : i32 to index
      %c0_23 = arith.constant 0 : index
      %c0_24 = arith.constant 0 : index
      %41 = vector.load %arg7[%40, %c0_23, %c0_24] : memref<2x8x256xf32, #tpu.memory_space<vmem>>, vector<1x8x256xf32>
      %42 = vector.shape_cast %41 : vector<1x8x256xf32> to vector<8x256xf32>
      %43 = vector.shape_cast %39 : vector<8x256xf32> to vector<1x8x256xf32>
      tpu.vector_store %arg7[%40, %c0_23, %c0_24], %43 {strides = array<i32>} : memref<2x8x256xf32, #tpu.memory_space<vmem>>, vector<1x8x256xf32>,
    } else {
    }
    return
  }
  func.func @transform_0(%arg0: i32, %arg1: i32) -> (i32, i32, i32) {
    %c1_i32 = arith.constant 1 : i32
    %0 = arith.subi %c1_i32, %arg0 : i32
    %1 = arith.muli %arg1, %0 : i32
    %c0_i32 = arith.constant 0 : i32
    %2 = arith.muli %arg0, %c0_i32 : i32
    %3 = arith.addi %1, %2 : i32
    %c0_i32_0 = arith.constant 0 : i32
    %c0_i32_1 = arith.constant 0 : i32
    %c0_i32_2 = arith.constant 0 : i32
    return %3, %c0_i32_0, %c0_i32_1 : i32, i32, i32
  }
  func.func @transform_1(%arg0: i32, %arg1: i32) -> (i32, i32, i32) {
    %c0_i32 = arith.constant 0 : i32
    %c0_i32_0 = arith.constant 0 : i32
    %c0_i32_1 = arith.constant 0 : i32
    %c0_i32_2 = arith.constant 0 : i32
    return %c0_i32, %c0_i32_0, %c0_i32_1 : i32, i32, i32
  }
  func.func @transform_2(%arg0: i32, %arg1: i32) -> (i32, i32) {
    %c0_i32 = arith.constant 0 : i32
    %c0_i32_0 = arith.constant 0 : i32
    %c0_i32_1 = arith.constant 0 : i32
    return %c0_i32, %c0_i32_0 : i32, i32
  }
  func.func @transform_3(%arg0: i32, %arg1: i32) -> (i32, i32) {
    %c0_i32 = arith.constant 0 : i32
    %c0_i32_0 = arith.constant 0 : i32
    %c0_i32_1 = arith.constant 0 : i32
    return %c0_i32, %c0_i32_0 : i32, i32
  }
  func.func @transform_4(%arg0: i32, %arg1: i32) -> (i32, i32) {
    %c0_i32 = arith.constant 0 : i32
    %c0_i32_0 = arith.constant 0 : i32
    %c0_i32_1 = arith.constant 0 : i32
    return %c0_i32, %c0_i32_0 : i32, i32
  }
  func.func @transform_5(%arg0: i32, %arg1: i32) -> (i32, i32, i32) {
    %c0_i32 = arith.constant 0 : i32
    %c0_i32_0 = arith.constant 0 : i32
    %c0_i32_1 = arith.constant 0 : i32
    %c0_i32_2 = arith.constant 0 : i32
    return %c0_i32, %c0_i32_0, %c0_i32_1 : i32, i32, i32
  }
}

</mosaic_0001>

<llo_original>
// kernel: tpu_custom_call.1
$region0: #{tpu_custom_call.1}
  #allocation0 [shape = 'u32[]', space=smem, size = 0x4, offset = 0x4, fixed_abs, tag = 'smem constant byte address 0x4 - core index']
  #allocation1 [shape = 'u32[144,128]{1,0:T(1,128)}', space=vmem, size = 0x12000, scoped, tag = 'internal scratch']
  #allocation2 [shape = 'f32[8,1]{1,0:T(8,128)}', space=vmem, size = 0x1000, scoped, tag = 'scratch operand']
  #allocation3 [shape = 'f32[8,1]{1,0:T(8,128)}', space=vmem, size = 0x1000, scoped, tag = 'scratch operand']
  #allocation4 [shape = 'f32[8,1]{1,0:T(8,128)}', space=vmem, size = 0x1000, scoped, tag = 'scratch operand']
  #allocation5 [shape = 'f32[8,1]{1,0:T(8,128)}', space=vmem, size = 0x1000, scoped, tag = 'scratch operand']
  %s0 = inlined_call_operand.vmem [shape: bf16[2,4,256], index: 0, kind: input, shape index: {}]
  %s1 = inlined_call_operand.vmem [shape: bf16[3,8,4], index: 1, kind: input, shape index: {}]
  %s2 = inlined_call_operand.vmem [shape: f32[8,1], index: 2, kind: input, shape index: {}]
  %s3 = inlined_call_operand.vmem [shape: f32[8,1], index: 3, kind: input, shape index: {}]
  %s4 = inlined_call_operand.vmem [shape: f32[8,1], index: 4, kind: input, shape index: {}]
  %s5 = inlined_call_operand.hbm [shape: f32[2,8,256], index: 5, kind: output, shape index: {}]
  %s6 = sld [smem:[#allocation0]]
  $region69: #{tpu_custom_call.1} parent=0
    _
  %s8 = ssub.s32 1, %s6
  %s9 = scalar_select 0, %s8, %s6
  $region1: #{tpu_custom_call.1} parent=0
    #allocation6 [shape = 'u8[16384]{0}', space=vmem, size = 0x4000, scoped, tag = 'output window, operand 0, single buffered']
    #allocation7 [shape = 's32[2]{0}', space=sflag, size = 0x8, scoped, tag = 'scoped memory for tpu_custom_call.1']
    %10 = vsyncpa [#allocation7], 0
    loop: start=0, step=1, limit=4
    $region2: #{tpu_custom_call.1} parent=1 // loop_pre_header
      _
    $region3: #{tpu_custom_call.1} parent=1 // loop_header
      %s12 = sphi 0, %s16
      %p13 = scmp.ge.s32.totalorder %s12, 4
      %s19 = sphi 0, %s31
      %s20 = sphi 0, %s27
      %s21 = sphi 0, %s19
      %s22 = sphi 0, %s20
      %s23 = sphi 0, %s21
      %s24 = sphi 0, %s22
      %s38 = sphi 0, %s40
      %s41 = sphi 0, %s38
      %s42 = sphi 0, %s41
      %s58 = sphi 0, %s42
      %s62 = sphi 0, %s62
      %s64 = sphi 0, %s62
      %s65 = sphi 0, %s64
      %s79 = sphi 0, %s65
      %s83 = sphi 0, %s83
      %s85 = sphi 0, %s83
      %s86 = sphi 0, %s85
      %s100 = sphi 0, %s86
      %s104 = sphi 0, %s104
      %s106 = sphi 0, %s104
      %s107 = sphi 0, %s106
      %s121 = sphi 0, %s107
      %s125 = sphi 0, %s125
      %s127 = sphi 0, %s125
      %s128 = sphi 0, %s127
      %s142 = sphi 0, %s128
      %s146 = sphi 0, %s146
      %s148 = sphi 0, %s146
      %s149 = sphi 0, %s148
      %s163 = sphi 0, %s149
    $region4: #{tpu_custom_call.1} parent=1 // loop_header_branch
      %15 = sbr.rel (%p13) target = $region8
    $region5: #{tpu_custom_call.1} parent=1 // loop_body
      %s17 = ssub.s32 %s12, 1
      %s18 = ssub.s32 %s12, 2
      %s25 = sadd.s32 1, %s20
      %p26 = scmp.ge.s32.totalorder %s25, 1
      %s27 = scalar_select %p26, 0, %s25
      %s28 = sadd.s32 1, %s19
      %s29 = scalar_select %p26, %s28, %s19
      %p30 = scmp.ge.s32.totalorder %s29, 2
      %s31 = scalar_select %p30, 0, %s29
      %s32 = ssub.s32 1, %s19
      %s33 = smul.u32 %s20, %s32
      %s34 = ssub.s32 1, %s31
      %s35 = smul.u32 %s27, %s34
      %s36 = ssub.s32 %s33, %s35
      %p37 = scmp.eq.s32.totalorder %s36, 0
      %s39 = sadd.s32 %s38, 1
      %s40 = scalar_select %p37, %s38, %s39
      %p43 = pneg %p37
      %p44 = scmp.eq.s32.totalorder %s12, 1
      %p45 = por %p43, %p44
      %p46 = scmp.ne.s32.totalorder %s38, %s41
      %p47 = scmp.eq.s32.totalorder %s12, 0
      %p48 = por %p46, %p47
      %p49 = scmp.ne.s32.totalorder %s38, %s41
      %p50 = scmp.eq.s32.totalorder %s17, 1
      %p51 = por %p49, %p50
      %p52 = scmp.ne.s32.totalorder %s41, %s42
      %p53 = scmp.eq.s32.totalorder %s17, 0
      %p54 = por %p52, %p53
      %p55 = scmp.ne.s32.totalorder %s41, %s42
      %p56 = scmp.eq.s32.totalorder %s18, 1
      %p57 = por %p55, %p56
      %p59 = scmp.ne.s32.totalorder %s42, %s58
      %p60 = scmp.eq.s32.totalorder %s18, 0
      %p61 = por %p59, %p60
      %s63 = sadd.s32 %s62, 1
      %p66 = scmp.eq.s32.totalorder %s12, 1
      %p67 = scmp.ne.s32.totalorder %s62, %s64
      %p68 = scmp.eq.s32.totalorder %s12, 0
      %p69 = por %p67, %p68
      %p70 = scmp.ne.s32.totalorder %s62, %s64
      %p71 = scmp.eq.s32.totalorder %s17, 1
      %p72 = por %p70, %p71
      %p73 = scmp.ne.s32.totalorder %s64, %s65
      %p74 = scmp.eq.s32.totalorder %s17, 0
      %p75 = por %p73, %p74
      %p76 = scmp.ne.s32.totalorder %s64, %s65
      %p77 = scmp.eq.s32.totalorder %s18, 1
      %p78 = por %p76, %p77
      %p80 = scmp.ne.s32.totalorder %s65, %s79
      %p81 = scmp.eq.s32.totalorder %s18, 0
      %p82 = por %p80, %p81
      %s84 = sadd.s32 %s83, 1
      %p87 = scmp.eq.s32.totalorder %s12, 1
      %p88 = scmp.ne.s32.totalorder %s83, %s85
      %p89 = scmp.eq.s32.totalorder %s12, 0
      %p90 = por %p88, %p89
      %p91 = scmp.ne.s32.totalorder %s83, %s85
      %p92 = scmp.eq.s32.totalorder %s17, 1
      %p93 = por %p91, %p92
      %p94 = scmp.ne.s32.totalorder %s85, %s86
      %p95 = scmp.eq.s32.totalorder %s17, 0
      %p96 = por %p94, %p95
      %p97 = scmp.ne.s32.totalorder %s85, %s86
      %p98 = scmp.eq.s32.totalorder %s18, 1
      %p99 = por %p97, %p98
      %p101 = scmp.ne.s32.totalorder %s86, %s100
      %p102 = scmp.eq.s32.totalorder %s18, 0
      %p103 = por %p101, %p102
      %s105 = sadd.s32 %s104, 1
      %p108 = scmp.eq.s32.totalorder %s12, 1
      %p109 = scmp.ne.s32.totalorder %s104, %s106
      %p110 = scmp.eq.s32.totalorder %s12, 0
      %p111 = por %p109, %p110
      %p112 = scmp.ne.s32.totalorder %s104, %s106
      %p113 = scmp.eq.s32.totalorder %s17, 1
      %p114 = por %p112, %p113
      %p115 = scmp.ne.s32.totalorder %s106, %s107
      %p116 = scmp.eq.s32.totalorder %s17, 0
      %p117 = por %p115, %p116
      %p118 = scmp.ne.s32.totalorder %s106, %s107
      %p119 = scmp.eq.s32.totalorder %s18, 1
      %p120 = por %p118, %p119
      %p122 = scmp.ne.s32.totalorder %s107, %s121
      %p123 = scmp.eq.s32.totalorder %s18, 0
      %p124 = por %p122, %p123
      %s126 = sadd.s32 %s125, 1
      %p129 = scmp.eq.s32.totalorder %s12, 1
      %p130 = scmp.ne.s32.totalorder %s125, %s127
      %p131 = scmp.eq.s32.totalorder %s12, 0
      %p132 = por %p130, %p131
      %p133 = scmp.ne.s32.totalorder %s125, %s127
      %p134 = scmp.eq.s32.totalorder %s17, 1
      %p135 = por %p133, %p134
      %p136 = scmp.ne.s32.totalorder %s127, %s128
      %p137 = scmp.eq.s32.totalorder %s17, 0
      %p138 = por %p136, %p137
      %p139 = scmp.ne.s32.totalorder %s127, %s128
      %p140 = scmp.eq.s32.totalorder %s18, 1
      %p141 = por %p139, %p140
      %p143 = scmp.ne.s32.totalorder %s128, %s142
      %p144 = scmp.eq.s32.totalorder %s18, 0
      %p145 = por %p143, %p144
      %s147 = sadd.s32 %s146, 1
      %p150 = scmp.eq.s32.totalorder %s12, 1
      %p151 = scmp.ne.s32.totalorder %s146, %s148
      %p152 = scmp.eq.s32.totalorder %s12, 0
      %p153 = por %p151, %p152
      %p154 = scmp.ne.s32.totalorder %s146, %s148
      %p155 = scmp.eq.s32.totalorder %s17, 1
      %p156 = por %p154, %p155
      %p157 = scmp.ne.s32.totalorder %s148, %s149
      %p158 = scmp.eq.s32.totalorder %s17, 0
      %p159 = por %p157, %p158
      %p160 = scmp.ne.s32.totalorder %s148, %s149
      %p161 = scmp.eq.s32.totalorder %s18, 1
      %p162 = por %p160, %p161
      %p164 = scmp.ne.s32.totalorder %s149, %s163
      %p165 = scmp.eq.s32.totalorder %s18, 0
      %p166 = por %p164, %p165
      %p167 = scmp.le.s32.totalorder 1, %s12
      %p168 = scmp.lt.s32.totalorder %s12, 3
      %p169 = pnand %p167, %p168
      %p170 = pneg %p169
      // Predicated region
      $region9: #{tpu_custom_call.1} parent=5 // pred_check
        _
      $region10: #{tpu_custom_call.1} parent=5 // pred_check_branch
        %172 = sbr.rel (%p169) target = $region12
      $region11: #{tpu_custom_call.1} parent=5 // pred_region
        %s173 = ssub.s32 %s12, 1
        // Predicated region
        $region13: #{tpu_custom_call.1} parent=11 // pred_check
          %p174 = pneg %p75
        $region14: #{tpu_custom_call.1} parent=11 // pred_check_branch
          %176 = sbr.rel (%p174) target = $region16
        $region15: #{tpu_custom_call.1} parent=11 // pred_region
          _
        $region16: #{tpu_custom_call.1} parent=11 // pred_fallthru
          _
        // Predicated region
        $region17: #{tpu_custom_call.1} parent=11 // pred_check
          %p177 = pneg %p96
        $region18: #{tpu_custom_call.1} parent=11 // pred_check_branch
          %179 = sbr.rel (%p177) target = $region20
        $region19: #{tpu_custom_call.1} parent=11 // pred_region
          _
        $region20: #{tpu_custom_call.1} parent=11 // pred_fallthru
          _
        // Predicated region
        $region21: #{tpu_custom_call.1} parent=11 // pred_check
          %p180 = pneg %p117
        $region22: #{tpu_custom_call.1} parent=11 // pred_check_branch
          %182 = sbr.rel (%p180) target = $region24
        $region23: #{tpu_custom_call.1} parent=11 // pred_region
          _
        $region24: #{tpu_custom_call.1} parent=11 // pred_fallthru
          _
        // Predicated region
        $region25: #{tpu_custom_call.1} parent=11 // pred_check
          %p183 = pneg %p138
        $region26: #{tpu_custom_call.1} parent=11 // pred_check_branch
          %185 = sbr.rel (%p183) target = $region28
        $region27: #{tpu_custom_call.1} parent=11 // pred_region
          _
        $region28: #{tpu_custom_call.1} parent=11 // pred_fallthru
          _
      $region12: #{tpu_custom_call.1} parent=5 // pred_fallthru
        _
      %p186 = scmp.lt.s32.totalorder %s12, 2
      // Predicated region
      $region29: #{tpu_custom_call.1} parent=5 // pred_check
        %p187 = pneg %p186
      $region30: #{tpu_custom_call.1} parent=5 // pred_check_branch
        %189 = sbr.rel (%p187) target = $region32
      $region31: #{tpu_custom_call.1} parent=5 // pred_region
        // Predicated region
        $region33: #{tpu_custom_call.1} parent=31 // pred_check
          %p190 = pneg %p48
        $region34: #{tpu_custom_call.1} parent=31 // pred_check_branch
          %192 = sbr.rel (%p190) target = $region36
        $region35: #{tpu_custom_call.1} parent=31 // pred_region
          %s193 = ssub.s32 1, %s19
          %s194 = smul.u32 %s20, %s193
          %s195 = smul.u32 2, %s194
          %p196 = scmp.lt.s32.totalorder %s195, 1
          %s197 = scalar_select %p196, %s195, 1
          %s198 = smul.addr %s197, 2
          %s199 = smul.addr %s198, 2
          %s200 = scalar_lea.vmem %s0, %s199
          %s201 = ssub.s32 1, %s19
          %s202 = smul.u32 %s20, %s201
          %s203 = smul.u32 2, %s202
        $region36: #{tpu_custom_call.1} parent=31 // pred_fallthru
          _
      $region32: #{tpu_custom_call.1} parent=5 // pred_fallthru
        _
      %p204 = scmp.le.s32.totalorder 1, %s12
      %p205 = scmp.lt.s32.totalorder %s12, 3
      %p206 = pnand %p204, %p205
      %p207 = pneg %p206
      // Predicated region
      $region37: #{tpu_custom_call.1} parent=5 // pred_check
        _
      $region38: #{tpu_custom_call.1} parent=5 // pred_check_branch
        %209 = sbr.rel (%p206) target = $region40
      $region39: #{tpu_custom_call.1} parent=5 // pred_region
        %s210 = ssub.s32 %s12, 1
        %s211 = ssub.s32 1, %s21
        %s212 = smul.u32 %s22, %s211
        %s213 = smul.u32 2, %s212
        %p214 = scmp.lt.s32.totalorder %s213, 1
        %s215 = scalar_select %p214, %s213, 1
        %s216 = smul.addr %s215, 2
        %s217 = smul.addr %s216, 2
        %s218 = scalar_lea.vmem %s0, %s217
        %p219 = pneg %p54
        %p220 = pneg %p51
        %p221 = pneg %p75
        %p222 = pneg %p72
        %p223 = pneg %p96
        %p224 = pneg %p93
        %p225 = pneg %p117
        %p226 = pneg %p114
        %p227 = pneg %p138
        %p228 = pneg %p135
        %p229 = pneg %p159
        %p230 = pneg %p156
        %s231 = ssub.s32 1, %s21
        %s232 = smul.u32 %s22, %s231
        %s233 = smul.u32 2, %s232
        %p234 = scmp.lt.s32.totalorder %s233, 1
        %s235 = scalar_select %p234, %s233, 1
        %s236 = smul.addr %s235, 2
        %s237 = smul.addr %s236, 2
        %s238 = scalar_lea.vmem %s0, %s237
        %s239 = ssub.s32 1, %s21
        %s240 = smul.u32 %s22, %s239
        %s241 = smul.u32 2, %s240
        %p243 = scmp.eq.s32.totalorder %s21, 0
        %p244 = scmp.eq.s32.totalorder %s22, 0
        %p245 = pnand %p243, %p244
        %p246 = pneg %p245
        // Predicated region
        $region41: #{tpu_custom_call.1} parent=39 // pred_check
          _
        $region42: #{tpu_custom_call.1} parent=39 // pred_check_branch
          %248 = sbr.rel (%p245) target = $region44
        $region43: #{tpu_custom_call.1} parent=39 // pred_region
          %vm249 = vcmask 7168
          %250 = vst.msk [vmem:[#allocation2] sm:$0xff] %vm249, 0.0
          %251 = vst.msk [vmem:[#allocation3] sm:$0xff] %vm249, 0.0
        $region44: #{tpu_custom_call.1} parent=39 // pred_fallthru
          _
        // Predicated region
        $region45: #{tpu_custom_call.1} parent=39 // pred_check
          %p252 = pneg %p243
        $region46: #{tpu_custom_call.1} parent=39 // pred_check_branch
          %254 = sbr.rel (%p252) target = $region48
        $region47: #{tpu_custom_call.1} parent=39 // pred_region
          %s255 = smul.u32 %s22, 2
          %v256 = vld [vmem:[%s2] sm:$0xff]
          %258 = vset.pattern.permute.xlu0 0
          %259 = vperm.xlu0 %258, %v256
          %v260 = vpop.permute.xlu0 %259
          %s262 = smul.u32 %s255, 2
          %s263 = smul.addr %s262, 8
          %s264 = scalar_lea.vmem [#allocation6], %s263
          %265 = vst [vmem:[%s264] sm:$0xff] %v260
          %266 = vst [vmem:[%s264 + $0x8] sm:$0xff] %v260
          %v267 = vld [vmem:[%s264] sm:$0xff]
          %v268 = vld [vmem:[%s264 + $0x8] sm:$0xff]
          %v269 = vld [vmem:[%s1] sm:$0xf]
          %v270 = vld [vmem:[%s238] sm:$0xf]
          %v273 = vunpack.c.l.s4 1983009808
          %v274 = vunpack.c.0.s8 %v273
          %v275 = vlaneseq
          %v276 = vshrl.u32 %v275, 7
          %v277 = vsub.s32 %v274, %v276
          %v278 = vrot.slane %v270, %v277
          %v279 = vcombine.high %v278, %v278
          %vm280 = vcmask 31744
          %v282 = vsel %vm280, %v269, 0
          %vm284 = vcmask 1041408
          %v286 = vsel %vm284, %v278, 0
          %v289 = vsel %vm284, %v279, 0
          %291 = vmatprep.subr.bf16.mxu0 0
          %292 = vmatpush1.bf16.msra.mxu0 0
          %293 = vmatprep.subr.bf16.mxu0 0
          %294 = vmatpush1.bf16.msra.mxu0 0
          %295 = vmatprep.subr.bf16.mxu0 0
          %296 = vmatpush1.bf16.msra.mxu0 0
          %297 = vmatprep.subr.bf16.mxu0 0
          %298 = vmatpush1.bf16.msra.mxu0 0
          %299 = vmatprep.subr.bf16.mxu0 0
          %300 = vmatpush1.bf16.msra.mxu0 0
          %301 = vmatprep.subr.bf16.mxu0 0
          %302 = vmatpush1.bf16.msra.mxu0 0
          %303 = vmatprep.subr.bf16.mxu0 0
          %304 = vmatpush1.bf16.msra.mxu0 0
          %305 = vmatprep.subr.bf16.mxu0 %v289
          %306 = vmatpush1.bf16.msra.mxu0 %v286
          %307 = vmatprep.subr.bf16.mxu0 0
          %308 = vmatpush2.bf16.msra.mxu0 0
          %309 = vmatprep.subr.bf16.mxu0 0
          %310 = vmatpush2.bf16.msra.mxu0 0
          %311 = vmatprep.subr.bf16.mxu0 0
          %312 = vmatpush2.bf16.msra.mxu0 0
          %313 = vmatprep.subr.bf16.mxu0 0
          %314 = vmatpush2.bf16.msra.mxu0 0
          %315 = vmatprep.subr.bf16.mxu0 0
          %316 = vmatpush2.bf16.msra.mxu0 0
          %317 = vmatprep.subr.bf16.mxu0 0
          %318 = vmatpush2.bf16.msra.mxu0 0
          %319 = vmatprep.subr.bf16.mxu0 0
          %320 = vmatpush2.bf16.msra.mxu0 0
          %321 = vmatprep.subr.bf16.mxu0 0
          %322 = vmatpush2.bf16.msra.mxu0 0
          %323 = vmatprep.mubr.bf16.mxu0 0
          %324 = vmatmul.mubr.bf16.gmra.mxu0 %v282
          %v325 = vpop.f32.mrf.mxu0
          %v326 = vadd.f32 0.0, %v325
          %v327 = vpop.f32.mrf.mxu0
          %v328 = vadd.f32 0.0, %v327
          %v329 = vpop.f32.mrf.mxu0
          %v330 = vpop.f32.mrf.mxu0
          %331 = vdwg.mxu0
          %334 = vrot.lane.b32.xlu0 %v326, 16
          %v335 = vpop.permute.xlu0 %334
          %336 = vrot.lane.b32.xlu0 %v328, 16
          %v337 = vpop.permute.xlu0 %336
          %vm338 = vcmask 130048
          %v339 = vsel %vm338, %v335, %v337
          %v342 = vadd.f32 %v267, %v335
          %v343 = vadd.f32 %v268, %v339
          %vm344 = vcmask 1047680
          %345 = vst.msk [vmem:[%s264] sm:$0xff] %vm344, %v342
          %346 = vst [vmem:[%s264 + $0x8] sm:$0xff] %v343
          %v347 = vld [vmem:[%s264] sm:$0xff]
          %v348 = vld [vmem:[%s264 + $0x8] sm:$0xff]
          %s349 = scalar_lea.vmem %s1, 4
          %v350 = vld [vmem:[%s349] sm:$0xf]
          %v351 = vld [vmem:[%s238] sm:$0xf]
          %v354 = vunpack.c.l.s4 1983009808
          %v355 = vunpack.c.0.s8 %v354
          %v356 = vlaneseq
          %v357 = vshrl.u32 %v356, 7
          %v358 = vsub.s32 %v355, %v357
          %v359 = vrot.slane %v351, %v358
          %v360 = vcombine.high %v359, %v359
          %v362 = vsel %vm280, %v350, 0
          %v365 = vsel %vm284, %v359, 0
          %v368 = vsel %vm284, %v360, 0
          %370 = vmatprep.subr.bf16.mxu0 0
          %371 = vmatpush1.bf16.msra.mxu0 0
          %372 = vmatprep.subr.bf16.mxu0 0
          %373 = vmatpush1.bf16.msra.mxu0 0
          %374 = vmatprep.subr.bf16.mxu0 0
          %375 = vmatpush1.bf16.msra.mxu0 0
          %376 = vmatprep.subr.bf16.mxu0 0
          %377 = vmatpush1.bf16.msra.mxu0 0
          %378 = vmatprep.subr.bf16.mxu0 0
          %379 = vmatpush1.bf16.msra.mxu0 0
          %380 = vmatprep.subr.bf16.mxu0 0
          %381 = vmatpush1.bf16.msra.mxu0 0
          %382 = vmatprep.subr.bf16.mxu0 0
          %383 = vmatpush1.bf16.msra.mxu0 0
          %384 = vmatprep.subr.bf16.mxu0 %v368
          %385 = vmatpush1.bf16.msra.mxu0 %v365
          %386 = vmatprep.subr.bf16.mxu0 0
          %387 = vmatpush2.bf16.msra.mxu0 0
          %388 = vmatprep.subr.bf16.mxu0 0
          %389 = vmatpush2.bf16.msra.mxu0 0
          %390 = vmatprep.subr.bf16.mxu0 0
          %391 = vmatpush2.bf16.msra.mxu0 0
          %392 = vmatprep.subr.bf16.mxu0 0
          %393 = vmatpush2.bf16.msra.mxu0 0
          %394 = vmatprep.subr.bf16.mxu0 0
          %395 = vmatpush2.bf16.msra.mxu0 0
          %396 = vmatprep.subr.bf16.mxu0 0
          %397 = vmatpush2.bf16.msra.mxu0 0
          %398 = vmatprep.subr.bf16.mxu0 0
          %399 = vmatpush2.bf16.msra.mxu0 0
          %400 = vmatprep.subr.bf16.mxu0 0
          %401 = vmatpush2.bf16.msra.mxu0 0
          %402 = vmatprep.mubr.bf16.mxu0 0
          %403 = vmatmul.mubr.bf16.gmra.mxu0 %v362
          %v404 = vpop.f32.mrf.mxu0
          %v405 = vadd.f32 0.0, %v404
          %v406 = vpop.f32.mrf.mxu0
          %v407 = vadd.f32 0.0, %v406
          %v408 = vpop.f32.mrf.mxu0
          %v409 = vpop.f32.mrf.mxu0
          %410 = vdwg.mxu0
          %v411 = vadd.f32 %v347, %v405
          %v412 = vadd.f32 %v348, %v407
          %413 = vst [vmem:[%s264] sm:$0xff] %v411
          %414 = vst [vmem:[%s264 + $0x8] sm:$0xff] %v412
          %v415 = vld [vmem:[%s264] sm:$0xff]
          %v416 = vld [vmem:[%s264 + $0x8] sm:$0xff]
          %s417 = scalar_lea.vmem %s1, 8
          %v418 = vld [vmem:[%s417] sm:$0xf]
          %v419 = vld [vmem:[%s238] sm:$0xf]
          %v422 = vunpack.c.l.s4 1983009808
          %v423 = vunpack.c.0.s8 %v422
          %v424 = vlaneseq
          %v425 = vshrl.u32 %v424, 7
          %v426 = vsub.s32 %v423, %v425
          %v427 = vrot.slane %v419, %v426
          %v428 = vcombine.high %v427, %v427
          %429 = vrot.lane.b32.xlu0 %v427, 112
          %v430 = vpop.permute.xlu0 %429
          %431 = vrot.lane.b32.xlu0 %v428, 112
          %v432 = vpop.permute.xlu0 %431
          %vm433 = vcmask 916480
          %v434 = vsel %vm433, %v430, %v432
          %v436 = vsel %vm280, %v418, 0
          %v439 = vsel %vm284, %v434, 0
          %v442 = vsel %vm284, %v432, 0
          %444 = vmatprep.subr.bf16.mxu0 0
          %445 = vmatpush1.bf16.msra.mxu0 0
          %446 = vmatprep.subr.bf16.mxu0 0
          %447 = vmatpush1.bf16.msra.mxu0 0
          %448 = vmatprep.subr.bf16.mxu0 0
          %449 = vmatpush1.bf16.msra.mxu0 0
          %450 = vmatprep.subr.bf16.mxu0 0
          %451 = vmatpush1.bf16.msra.mxu0 0
          %452 = vmatprep.subr.bf16.mxu0 0
          %453 = vmatpush1.bf16.msra.mxu0 0
          %454 = vmatprep.subr.bf16.mxu0 0
          %455 = vmatpush1.bf16.msra.mxu0 0
          %456 = vmatprep.subr.bf16.mxu0 0
          %457 = vmatpush1.bf16.msra.mxu0 0
          %458 = vmatprep.subr.bf16.mxu0 %v442
          %459 = vmatpush1.bf16.msra.mxu0 %v439
          %460 = vmatprep.subr.bf16.mxu0 0
          %461 = vmatpush2.bf16.msra.mxu0 0
          %462 = vmatprep.subr.bf16.mxu0 0
          %463 = vmatpush2.bf16.msra.mxu0 0
          %464 = vmatprep.subr.bf16.mxu0 0
          %465 = vmatpush2.bf16.msra.mxu0 0
          %466 = vmatprep.subr.bf16.mxu0 0
          %467 = vmatpush2.bf16.msra.mxu0 0
          %468 = vmatprep.subr.bf16.mxu0 0
          %469 = vmatpush2.bf16.msra.mxu0 0
          %470 = vmatprep.subr.bf16.mxu0 0
          %471 = vmatpush2.bf16.msra.mxu0 0
          %472 = vmatprep.subr.bf16.mxu0 0
          %473 = vmatpush2.bf16.msra.mxu0 0
          %474 = vmatprep.subr.bf16.mxu0 0
          %475 = vmatpush2.bf16.msra.mxu0 0
          %476 = vmatprep.mubr.bf16.mxu0 0
          %477 = vmatmul.mubr.bf16.gmra.mxu0 %v436
          %v478 = vpop.f32.mrf.mxu0
          %v479 = vadd.f32 0.0, %v478
          %v480 = vpop.f32.mrf.mxu0
          %v481 = vadd.f32 0.0, %v480
          %v482 = vpop.f32.mrf.mxu0
          %v483 = vpop.f32.mrf.mxu0
          %484 = vdwg.mxu0
          %v485 = vadd.f32 %v415, %v479
          %v486 = vadd.f32 %v416, %v481
          %487 = vst [vmem:[%s264] sm:$0xff] %v485
          %vm488 = vcmask 916480
          %489 = vst.msk [vmem:[%s264 + $0x8] sm:$0xff] %vm488, %v486
          %v490 = vld [vmem:[%s264] sm:$0xff]
          %v491 = vld [vmem:[%s264 + $0x8] sm:$0xff]
          %v492 = vld [vmem:[#allocation2] sm:$0xff]
          %v493 = vadd.f32 %v490, %v491
          %494 = vadd.xlane.f32.xlu0 %v493
          %v495 = vpop.xlane.xlu0 %494
          %v496 = vadd.f32 %v492, %v495
          %vm497 = vcmask 7168
          %498 = vst.msk [vmem:[#allocation2] sm:$0xff] %vm497, %v496
          %v499 = vld [vmem:[#allocation3] sm:$0xff]
          %v500 = vmul.f32 %v490, %v490
          %v501 = vmul.f32 %v491, %v491
          %v502 = vadd.f32 %v500, %v501
          %503 = vadd.xlane.f32.xlu0 %v502
          %v504 = vpop.xlane.xlu0 %503
          %v505 = vadd.f32 %v499, %v504
          %506 = vst.msk [vmem:[#allocation3] sm:$0xff] %vm497, %v505
          %s507 = sadd.s32 %s255, 1
          %v508 = vld [vmem:[%s2] sm:$0xff]
          %510 = vset.pattern.permute.xlu0 0
          %511 = vperm.xlu0 %510, %v508
          %v512 = vpop.permute.xlu0 %511
          %s514 = smul.u32 %s507, 2
          %s515 = smul.addr %s514, 8
          %s516 = scalar_lea.vmem [#allocation6], %s515
          %517 = vst [vmem:[%s516] sm:$0xff] %v512
          %518 = vst [vmem:[%s516 + $0x8] sm:$0xff] %v512
          %v519 = vld [vmem:[%s516] sm:$0xff]
          %v520 = vld [vmem:[%s516 + $0x8] sm:$0xff]
          %v521 = vld [vmem:[%s1] sm:$0xf]
          %s522 = scalar_lea.vmem %s238, 4
          %v523 = vld [vmem:[%s522] sm:$0xf]
          %v526 = vunpack.c.l.s4 1983009808
          %v527 = vunpack.c.0.s8 %v526
          %v528 = vlaneseq
          %v529 = vshrl.u32 %v528, 7
          %v530 = vsub.s32 %v527, %v529
          %v531 = vrot.slane %v523, %v530
          %v532 = vcombine.high %v531, %v531
          %v534 = vsel %vm280, %v521, 0
          %v537 = vsel %vm284, %v531, 0
          %v540 = vsel %vm284, %v532, 0
          %542 = vmatprep.subr.bf16.mxu0 0
          %543 = vmatpush1.bf16.msra.mxu0 0
          %544 = vmatprep.subr.bf16.mxu0 0
          %545 = vmatpush1.bf16.msra.mxu0 0
          %546 = vmatprep.subr.bf16.mxu0 0
          %547 = vmatpush1.bf16.msra.mxu0 0
          %548 = vmatprep.subr.bf16.mxu0 0
          %549 = vmatpush1.bf16.msra.mxu0 0
          %550 = vmatprep.subr.bf16.mxu0 0
          %551 = vmatpush1.bf16.msra.mxu0 0
          %552 = vmatprep.subr.bf16.mxu0 0
          %553 = vmatpush1.bf16.msra.mxu0 0
          %554 = vmatprep.subr.bf16.mxu0 0
          %555 = vmatpush1.bf16.msra.mxu0 0
          %556 = vmatprep.subr.bf16.mxu0 %v540
          %557 = vmatpush1.bf16.msra.mxu0 %v537
          %558 = vmatprep.subr.bf16.mxu0 0
          %559 = vmatpush2.bf16.msra.mxu0 0
          %560 = vmatprep.subr.bf16.mxu0 0
          %561 = vmatpush2.bf16.msra.mxu0 0
          %562 = vmatprep.subr.bf16.mxu0 0
          %563 = vmatpush2.bf16.msra.mxu0 0
          %564 = vmatprep.subr.bf16.mxu0 0
          %565 = vmatpush2.bf16.msra.mxu0 0
          %566 = vmatprep.subr.bf16.mxu0 0
          %567 = vmatpush2.bf16.msra.mxu0 0
          %568 = vmatprep.subr.bf16.mxu0 0
          %569 = vmatpush2.bf16.msra.mxu0 0
          %570 = vmatprep.subr.bf16.mxu0 0
          %571 = vmatpush2.bf16.msra.mxu0 0
          %572 = vmatprep.subr.bf16.mxu0 0
          %573 = vmatpush2.bf16.msra.mxu0 0
          %574 = vmatprep.mubr.bf16.mxu0 0
          %575 = vmatmul.mubr.bf16.gmra.mxu0 %v534
          %v576 = vpop.f32.mrf.mxu0
          %v577 = vadd.f32 0.0, %v576
          %v578 = vpop.f32.mrf.mxu0
          %v579 = vadd.f32 0.0, %v578
          %v580 = vpop.f32.mrf.mxu0
          %v581 = vpop.f32.mrf.mxu0
          %582 = vdwg.mxu0
          %585 = vrot.lane.b32.xlu0 %v577, 16
          %v586 = vpop.permute.xlu0 %585
          %587 = vrot.lane.b32.xlu0 %v579, 16
          %v588 = vpop.permute.xlu0 %587
          %v589 = vsel %vm338, %v586, %v588
          %v592 = vadd.f32 %v519, %v586
          %v593 = vadd.f32 %v520, %v589
          %594 = vst.msk [vmem:[%s516] sm:$0xff] %vm344, %v592
          %595 = vst [vmem:[%s516 + $0x8] sm:$0xff] %v593
          %v596 = vld [vmem:[%s516] sm:$0xff]
          %v597 = vld [vmem:[%s516 + $0x8] sm:$0xff]
          %v598 = vld [vmem:[%s349] sm:$0xf]
          %v599 = vld [vmem:[%s522] sm:$0xf]
          %v602 = vunpack.c.l.s4 1983009808
          %v603 = vunpack.c.0.s8 %v602
          %v604 = vlaneseq
          %v605 = vshrl.u32 %v604, 7
          %v606 = vsub.s32 %v603, %v605
          %v607 = vrot.slane %v599, %v606
          %v608 = vcombine.high %v607, %v607
          %v610 = vsel %vm280, %v598, 0
          %v613 = vsel %vm284, %v607, 0
          %v616 = vsel %vm284, %v608, 0
          %618 = vmatprep.subr.bf16.mxu0 0
          %619 = vmatpush1.bf16.msra.mxu0 0
          %620 = vmatprep.subr.bf16.mxu0 0
          %621 = vmatpush1.bf16.msra.mxu0 0
          %622 = vmatprep.subr.bf16.mxu0 0
          %623 = vmatpush1.bf16.msra.mxu0 0
          %624 = vmatprep.subr.bf16.mxu0 0
          %625 = vmatpush1.bf16.msra.mxu0 0
          %626 = vmatprep.subr.bf16.mxu0 0
          %627 = vmatpush1.bf16.msra.mxu0 0
          %628 = vmatprep.subr.bf16.mxu0 0
          %629 = vmatpush1.bf16.msra.mxu0 0
          %630 = vmatprep.subr.bf16.mxu0 0
          %631 = vmatpush1.bf16.msra.mxu0 0
          %632 = vmatprep.subr.bf16.mxu0 %v616
          %633 = vmatpush1.bf16.msra.mxu0 %v613
          %634 = vmatprep.subr.bf16.mxu0 0
          %635 = vmatpush2.bf16.msra.mxu0 0
          %636 = vmatprep.subr.bf16.mxu0 0
          %637 = vmatpush2.bf16.msra.mxu0 0
          %638 = vmatprep.subr.bf16.mxu0 0
          %639 = vmatpush2.bf16.msra.mxu0 0
          %640 = vmatprep.subr.bf16.mxu0 0
          %641 = vmatpush2.bf16.msra.mxu0 0
          %642 = vmatprep.subr.bf16.mxu0 0
          %643 = vmatpush2.bf16.msra.mxu0 0
          %644 = vmatprep.subr.bf16.mxu0 0
          %645 = vmatpush2.bf16.msra.mxu0 0
          %646 = vmatprep.subr.bf16.mxu0 0
          %647 = vmatpush2.bf16.msra.mxu0 0
          %648 = vmatprep.subr.bf16.mxu0 0
          %649 = vmatpush2.bf16.msra.mxu0 0
          %650 = vmatprep.mubr.bf16.mxu0 0
          %651 = vmatmul.mubr.bf16.gmra.mxu0 %v610
          %v652 = vpop.f32.mrf.mxu0
          %v653 = vadd.f32 0.0, %v652
          %v654 = vpop.f32.mrf.mxu0
          %v655 = vadd.f32 0.0, %v654
          %v656 = vpop.f32.mrf.mxu0
          %v657 = vpop.f32.mrf.mxu0
          %658 = vdwg.mxu0
          %v659 = vadd.f32 %v596, %v653
          %v660 = vadd.f32 %v597, %v655
          %661 = vst [vmem:[%s516] sm:$0xff] %v659
          %662 = vst [vmem:[%s516 + $0x8] sm:$0xff] %v660
          %v663 = vld [vmem:[%s516] sm:$0xff]
          %v664 = vld [vmem:[%s516 + $0x8] sm:$0xff]
          %v665 = vld [vmem:[%s417] sm:$0xf]
          %v666 = vld [vmem:[%s522] sm:$0xf]
          %v669 = vunpack.c.l.s4 1983009808
          %v670 = vunpack.c.0.s8 %v669
          %v671 = vlaneseq
          %v672 = vshrl.u32 %v671, 7
          %v673 = vsub.s32 %v670, %v672
          %v674 = vrot.slane %v666, %v673
          %v675 = vcombine.high %v674, %v674
          %676 = vrot.lane.b32.xlu0 %v674, 112
          %v677 = vpop.permute.xlu0 %676
          %678 = vrot.lane.b32.xlu0 %v675, 112
          %v679 = vpop.permute.xlu0 %678
          %v680 = vsel %vm433, %v677, %v679
          %v682 = vsel %vm280, %v665, 0
          %v685 = vsel %vm284, %v680, 0
          %v688 = vsel %vm284, %v679, 0
          %690 = vmatprep.subr.bf16.mxu0 0
          %691 = vmatpush1.bf16.msra.mxu0 0
          %692 = vmatprep.subr.bf16.mxu0 0
          %693 = vmatpush1.bf16.msra.mxu0 0
          %694 = vmatprep.subr.bf16.mxu0 0
          %695 = vmatpush1.bf16.msra.mxu0 0
          %696 = vmatprep.subr.bf16.mxu0 0
          %697 = vmatpush1.bf16.msra.mxu0 0
          %698 = vmatprep.subr.bf16.mxu0 0
          %699 = vmatpush1.bf16.msra.mxu0 0
          %700 = vmatprep.subr.bf16.mxu0 0
          %701 = vmatpush1.bf16.msra.mxu0 0
          %702 = vmatprep.subr.bf16.mxu0 0
          %703 = vmatpush1.bf16.msra.mxu0 0
          %704 = vmatprep.subr.bf16.mxu0 %v688
          %705 = vmatpush1.bf16.msra.mxu0 %v685
          %706 = vmatprep.subr.bf16.mxu0 0
          %707 = vmatpush2.bf16.msra.mxu0 0
          %708 = vmatprep.subr.bf16.mxu0 0
          %709 = vmatpush2.bf16.msra.mxu0 0
          %710 = vmatprep.subr.bf16.mxu0 0
          %711 = vmatpush2.bf16.msra.mxu0 0
          %712 = vmatprep.subr.bf16.mxu0 0
          %713 = vmatpush2.bf16.msra.mxu0 0
          %714 = vmatprep.subr.bf16.mxu0 0
          %715 = vmatpush2.bf16.msra.mxu0 0
          %716 = vmatprep.subr.bf16.mxu0 0
          %717 = vmatpush2.bf16.msra.mxu0 0
          %718 = vmatprep.subr.bf16.mxu0 0
          %719 = vmatpush2.bf16.msra.mxu0 0
          %720 = vmatprep.subr.bf16.mxu0 0
          %721 = vmatpush2.bf16.msra.mxu0 0
          %722 = vmatprep.mubr.bf16.mxu0 0
          %723 = vmatmul.mubr.bf16.gmra.mxu0 %v682
          %v724 = vpop.f32.mrf.mxu0
          %v725 = vadd.f32 0.0, %v724
          %v726 = vpop.f32.mrf.mxu0
          %v727 = vadd.f32 0.0, %v726
          %v728 = vpop.f32.mrf.mxu0
          %v729 = vpop.f32.mrf.mxu0
          %730 = vdwg.mxu0
          %v731 = vadd.f32 %v663, %v725
          %v732 = vadd.f32 %v664, %v727
          %733 = vst [vmem:[%s516] sm:$0xff] %v731
          %734 = vst.msk [vmem:[%s516 + $0x8] sm:$0xff] %vm488, %v732
          %v735 = vld [vmem:[%s516] sm:$0xff]
          %v736 = vld [vmem:[%s516 + $0x8] sm:$0xff]
          %v737 = vld [vmem:[#allocation2] sm:$0xff]
          %v738 = vadd.f32 %v735, %v736
          %739 = vadd.xlane.f32.xlu0 %v738
          %v740 = vpop.xlane.xlu0 %739
          %v741 = vadd.f32 %v737, %v740
          %742 = vst.msk [vmem:[#allocation2] sm:$0xff] %vm497, %v741
          %v743 = vld [vmem:[#allocation3] sm:$0xff]
          %v744 = vmul.f32 %v735, %v735
          %v745 = vmul.f32 %v736, %v736
          %v746 = vadd.f32 %v744, %v745
          %747 = vadd.xlane.f32.xlu0 %v746
          %v748 = vpop.xlane.xlu0 %747
          %v749 = vadd.f32 %v743, %v748
          %750 = vst.msk [vmem:[#allocation3] sm:$0xff] %vm497, %v749
        $region48: #{tpu_custom_call.1} parent=39 // pred_fallthru
          _
        %p751 = scmp.eq.s32.totalorder %s21, 1
        // Predicated region
        $region49: #{tpu_custom_call.1} parent=39 // pred_check
          %p752 = pneg %p751
        $region50: #{tpu_custom_call.1} parent=39 // pred_check_branch
          %754 = sbr.rel (%p752) target = $region52
        $region51: #{tpu_custom_call.1} parent=39 // pred_region
          // Predicated region
          $region53: #{tpu_custom_call.1} parent=51 // pred_check
            %p755 = pneg %p244
          $region54: #{tpu_custom_call.1} parent=51 // pred_check_branch
            %757 = sbr.rel (%p755) target = $region56
          $region55: #{tpu_custom_call.1} parent=51 // pred_region
            %v758 = vld [vmem:[#allocation2] sm:$0xff]
            %v759 = vmul.f32 %v758, 0.001953125
            %v760 = vld [vmem:[#allocation3] sm:$0xff]
            %v761 = vmul.f32 %v760, 0.001953125
            %v762 = vmul.f32 %v759, %v759
            %v763 = vsub.f32 %v761, %v762
            %v764 = vmax.f32 %v763, 0.0
            %v765 = vld [vmem:[%s3] sm:$0xff]
            %v766 = vadd.f32 %v764, 1e-05
            %v767 = vrsqrt.pop %v766
            %v768 = vmul.f32 %v765, %v767
            %vm769 = vcmask 7168
            %770 = vst.msk [vmem:[#allocation4] sm:$0xff] %vm769, %v768
            %v771 = vld [vmem:[%s4] sm:$0xff]
            %v772 = vmul.f32 %v759, %v768
            %v773 = vsub.f32 %v771, %v772
            %774 = vst.msk [vmem:[#allocation5] sm:$0xff] %vm769, %v773
          $region56: #{tpu_custom_call.1} parent=51 // pred_fallthru
            _
          %s775 = smul.u32 %s22, 2
          %s776 = smul.u32 %s775, 2
          %s777 = smul.addr %s776, 8
          %s778 = scalar_lea.vmem [#allocation6], %s777
          %v779 = vld [vmem:[%s778] sm:$0xff]
          %v780 = vld [vmem:[%s778 + $0x8] sm:$0xff]
          %v781 = vld [vmem:[#allocation4] sm:$0xff]
          %783 = vset.pattern.permute.xlu0 0
          %784 = vperm.xlu0 %783, %v781
          %v785 = vpop.permute.xlu0 %784
          %v787 = vmul.f32 %v779, %v785
          %v788 = vmul.f32 %v780, %v785
          %v789 = vld [vmem:[#allocation5] sm:$0xff]
          %791 = vset.pattern.permute.xlu0 0
          %792 = vperm.xlu0 %791, %v789
          %v793 = vpop.permute.xlu0 %792
          %v795 = vadd.f32 %v787, %v793
          %v796 = vadd.f32 %v788, %v793
          %797 = vst [vmem:[%s778] sm:$0xff] %v795
          %798 = vst [vmem:[%s778 + $0x8] sm:$0xff] %v796
          %s799 = sadd.s32 %s775, 1
          %s800 = smul.u32 %s799, 2
          %s801 = smul.addr %s800, 8
          %s802 = scalar_lea.vmem [#allocation6], %s801
          %v803 = vld [vmem:[%s802] sm:$0xff]
          %v804 = vld [vmem:[%s802 + $0x8] sm:$0xff]
          %v805 = vld [vmem:[#allocation4] sm:$0xff]
          %807 = vset.pattern.permute.xlu0 0
          %808 = vperm.xlu0 %807, %v805
          %v809 = vpop.permute.xlu0 %808
          %v811 = vmul.f32 %v803, %v809
          %v812 = vmul.f32 %v804, %v809
          %v813 = vld [vmem:[#allocation5] sm:$0xff]
          %815 = vset.pattern.permute.xlu0 0
          %816 = vperm.xlu0 %815, %v813
          %v817 = vpop.permute.xlu0 %816
          %v819 = vadd.f32 %v811, %v817
          %v820 = vadd.f32 %v812, %v817
          %821 = vst [vmem:[%s802] sm:$0xff] %v819
          %822 = vst [vmem:[%s802 + $0x8] sm:$0xff] %v820
        $region52: #{tpu_custom_call.1} parent=39 // pred_fallthru
          _
        // Predicated region
        $region57: #{tpu_custom_call.1} parent=39 // pred_check
          %p823 = pneg %p156
        $region58: #{tpu_custom_call.1} parent=39 // pred_check_branch
          %825 = sbr.rel (%p823) target = $region60
        $region59: #{tpu_custom_call.1} parent=39 // pred_region
          %s827 = ssub.s32 512, 512
          %828 = vsyncadd [#allocation7], %s827
          %s829 = sshll.u32 [#allocation6], 4
          %s830 = int_to_ptr.vmem [resolvable:$true] %s829
          %835 = dma.vmem_to_hbm [thread:$0]  %s830, 512, %s5, [#allocation7], 256, 256, 16
        $region60: #{tpu_custom_call.1} parent=39 // pred_fallthru
          _
        // Predicated region
        $region61: #{tpu_custom_call.1} parent=39 // pred_check
          %p836 = pneg %p156
        $region62: #{tpu_custom_call.1} parent=39 // pred_check_branch
          %838 = sbr.rel (%p836) target = $region64
        $region63: #{tpu_custom_call.1} parent=39 // pred_region
          %839 = dma.done [#allocation7], 512
        $region64: #{tpu_custom_call.1} parent=39 // pred_fallthru
          _
      $region40: #{tpu_custom_call.1} parent=5 // pred_fallthru
        _
      %p840 = scmp.le.s32.totalorder 2, %s12
      // Predicated region
      $region65: #{tpu_custom_call.1} parent=5 // pred_check
        %p841 = pneg %p840
      $region66: #{tpu_custom_call.1} parent=5 // pred_check_branch
        %843 = sbr.rel (%p841) target = $region68
      $region67: #{tpu_custom_call.1} parent=5 // pred_region
        %s844 = ssub.s32 %s12, 2
      $region68: #{tpu_custom_call.1} parent=5 // pred_fallthru
        _
    $region6: #{tpu_custom_call.1} parent=1 // loop_footer
      %s16 = sadd.s32 1, %s12
    $region7: #{tpu_custom_call.1} parent=1 // loop_footer_branch
      %11 = sbr.rel target = $region3
    $region8: #{tpu_custom_call.1} parent=1 // loop_exit
      _
    %845 = vsyncpa [#allocation7], 1
    %s846 = scalar_lea.sflag [#allocation7], 1
    %847 = vsyncpa %s846, 1

</llo_original>
